<compile_context>
chip_gen: v5e
topology: v5e:2x2
jax: 0.10.0
libtpu: 0.0.40
codegen_flags: <defaults>
</compile_context>

<pallas_src>
import jax
import jax.numpy as jnp
from jax.experimental import pallas as pl
from jax.experimental.pallas import tpu as pltpu


def _attention_kernel(g_ref, x_ref, wg_ref, wx_ref, bgx_ref, wpsi_ref,
                      bpsi_ref, o_ref):
    # MXU matmuls with activation-dtype operands (bf16 on the fast path);
    # accumulation stays f32 via preferred_element_type.
    g1 = jnp.dot(wg_ref[...], g_ref[...],
                 preferred_element_type=jnp.float32)          # (F_int, T)
    x1 = jnp.dot(wx_ref[...], x_ref[...],
                 preferred_element_type=jnp.float32)          # (F_int, T)
    a = jnp.maximum(g1 + x1 + bgx_ref[...], 0.0)              # ReLU, f32

    # width-1 conv as VPU multiply + sublane reduction; bpsi is an SMEM scalar.
    p = jnp.sum(a * wpsi_ref[...], axis=0, keepdims=True) + bpsi_ref[0]  # (1, T)
    psi = jax.nn.sigmoid(p).astype(o_ref.dtype)                # downcast 1xT once

    # Gate multiply + store in the packed activation dtype.
    # TODO(synk): for strict parity with PyTorch, x could be kept f32 for this
    # multiply; on the bf16 fast path x is quantized before the gate.
    o_ref[...] = x_ref[...] * psi                              # broadcast over F_l


def _fold_conv_bn(w, b, gamma, beta, mean, var, eps=1e-5):
    """Fold Conv1x1(w:(Cin,Cout), b:(Cout,)) followed by BatchNorm (inference)."""
    s = gamma / jnp.sqrt(var + eps)             # (Cout,)
    w_eff = w * s[None, :]
    b_eff = b * s + beta - mean * s
    return w_eff, b_eff


def _round_up(x, m):
    return ((x + m - 1) // m) * m


def _vmem_capacity_bytes():
    """Per-core VMEM capacity; conservative fallback if the query is missing."""
    try:
        info = pltpu.get_tpu_info()
        cap = getattr(info, "vmem_capacity_bytes", None)
        if cap:
            return int(cap)
    except Exception:
        pass
    return 64 * 1024 * 1024  # v7x-sized fallback (most conservative modern part)


def _est_vmem_bytes(tile_p, F_g, F_l, F_int, act_bytes):
    """Double-buffered IO + weights + in-kernel f32 temporaries for one tile."""
    r8 = lambda c: _round_up(c, 8)
    io = 2 * (r8(F_g) + 2 * r8(F_l)) * tile_p * act_bytes          # g, x, out (x2 bufs)
    wts = 2 * (r8(F_int) * (r8(F_g) + r8(F_l)) * act_bytes + 2 * r8(F_int) * 4)
    tmps = (3 * r8(F_int) + 8) * tile_p * 4                        # g1, x1, a, psi (f32)
    return io + wts + tmps


def attention_block(g, x, params, *, tile_p=1024, activation_dtype=jnp.bfloat16):
    """g: (N, F_g, H, W), x: (N, F_l, H, W)  ->  (N, F_l, H, W)  (NCHW).

    activation_dtype: dtype used for the HBM-resident activations (g, x, out)
    and the matmul operands.  bf16 (default) halves HBM traffic on this
    bandwidth-bound kernel and runs the MXU at native rate; math (accumulation,
    bias, ReLU, psi, sigmoid) stays f32.  Pass jnp.float32 for exact parity.
    """
    N, F_g, H, W = g.shape
    _, F_l, _, _ = x.shape
    F_int = params["wg"].shape[1]
    HW = H * W

    if activation_dtype is None:
        activation_dtype = x.dtype
    act_dtype = jnp.dtype(activation_dtype)
    act_bytes = act_dtype.itemsize

    # Fold BN into the 1x1-conv weights (plain-JAX glue); transpose to
    # (Cout, Cin) for the channels-major matmul; pre-sum the two pre-ReLU biases.
    wg, bg = _fold_conv_bn(params["wg"], params["bg"], *params["bn_g"])
    wx, bx = _fold_conv_bn(params["wx"], params["bx"], *params["bn_x"])
    wpsi, bpsi = _fold_conv_bn(params["wpsi"], params["bpsi"], *params["bn_psi"])

    wg_t = wg.T.astype(act_dtype)                        # (F_int, F_g)  MXU operand
    wx_t = wx.T.astype(act_dtype)                        # (F_int, F_l)  MXU operand
    bgx = (bg + bx).astype(jnp.float32).reshape(F_int, 1)
    wpsi_c = wpsi.astype(jnp.float32).reshape(F_int, 1)
    bpsi_c = bpsi.astype(jnp.float32).reshape(1)         # SMEM scalar

    # Channels-major flatten: NCHW -> (N, C, H*W).  No padding, no crop.
    g2 = g.reshape(N, F_g, HW).astype(act_dtype)
    x2 = x.reshape(N, F_l, HW).astype(act_dtype)

    # --- Tile selection -----------------------------------------------------
    cap = _vmem_capacity_bytes()
    budget = min(int(0.45 * cap), 64 * 1024 * 1024)      # what we plan to use
    vmem_limit = int(min(int(0.75 * cap), 96 * 1024 * 1024))

    if HW <= 256:
        tile = HW                                        # single full-dim block
    else:
        tile = _round_up(min(tile_p, HW), 128)
        tile = min(tile, _round_up(HW, 128))
        # Shrink only while over budget; never below 256 (a 128-lane tile is
        # ~3x off the HBM roofline on v5e).
        while tile > 256 and _est_vmem_bytes(tile, F_g, F_l, F_int, act_bytes) > budget:
            tile -= 128
        # Megacore (v7x): expose >= 2 programs when the batch can't.
        if N == 1 and pl.cdiv(HW, tile) < 2:
            tile = max(256, _round_up(pl.cdiv(HW, 2), 128))

    grid = (N, pl.cdiv(HW, tile))

    act_spec = lambda c: pl.BlockSpec((None, c, tile), lambda n, p: (n, 0, p))
    w_spec = lambda r, c: pl.BlockSpec((r, c), lambda n, p: (0, 0))
    smem_spec = pl.BlockSpec(memory_space=pltpu.MemorySpace.SMEM)

    cost = pl.CostEstimate(
        flops=int(2 * N * HW * F_int * (F_g + F_l + 1)),
        transcendentals=int(N * HW),
        bytes_accessed=int(N * HW * (F_g + 2 * F_l) * act_bytes
                           + F_int * (F_g + F_l) * act_bytes
                           + (2 * F_int + 1) * 4),
    )

    out = pl.pallas_call(
        _attention_kernel,
        out_shape=jax.ShapeDtypeStruct((N, F_l, HW), act_dtype),
        grid_spec=pltpu.PrefetchScalarGridSpec(
            num_scalar_prefetch=0,
            grid=grid,
            in_specs=[
                act_spec(F_g),          # g block   (F_g, tile)
                act_spec(F_l),          # x block   (F_l, tile)
                w_spec(F_int, F_g),     # Wg'^T
                w_spec(F_int, F_l),     # Wx'^T
                w_spec(F_int, 1),       # bg' + bx'
                w_spec(F_int, 1),       # Wpsi'
                smem_spec,              # bpsi'  (SMEM scalar)
            ],
            out_specs=act_spec(F_l),    # lane-dense output block
        ),
        compiler_params=pltpu.CompilerParams(
            dimension_semantics=("parallel", "parallel"),
            vmem_limit_bytes=vmem_limit),
        cost_estimate=cost,
    )(g2, x2, wg_t, wx_t, bgx, wpsi_c, bpsi_c)

    return out.reshape(N, F_l, H, W)


def attention_block_ref(g, x, params):
    """Pure-JAX reference (same folded-BN inference semantics)."""
    wg, bg = _fold_conv_bn(params["wg"], params["bg"], *params["bn_g"])
    wx, bx = _fold_conv_bn(params["wx"], params["bx"], *params["bn_x"])
    wpsi, bpsi = _fold_conv_bn(params["wpsi"], params["bpsi"], *params["bn_psi"])

    g_nhwc = g.transpose(0, 2, 3, 1)
    x_nhwc = x.transpose(0, 2, 3, 1)
    g1 = jnp.einsum("nhwc,cf->nhwf", g_nhwc, wg) + bg
    x1 = jnp.einsum("nhwc,cf->nhwf", x_nhwc, wx) + bx
    a = jnp.maximum(g1 + x1, 0.0)
    psi = jax.nn.sigmoid(jnp.einsum("nhwf,fo->nhwo", a, wpsi) + bpsi)
    out = x_nhwc * psi
    return out.transpose(0, 3, 1, 2)


def make_params(key, F_g, F_l, F_int, dtype=jnp.float32):
    ks = jax.random.split(key, 12)

    def bn_params(k, c):
        k1, k2, k3, k4 = jax.random.split(k, 4)
        gamma = 1.0 + 0.1 * jax.random.normal(k1, (c,), dtype)
        beta = 0.1 * jax.random.normal(k2, (c,), dtype)
        mean = 0.1 * jax.random.normal(k3, (c,), dtype)
        var = jnp.abs(jax.random.normal(k4, (c,), dtype)) + 0.5
        return (gamma, beta, mean, var)

    return {
        # Conv2d(Cin, Cout, 1) weight stored as (Cin, Cout) for matmul form.
        "wg": 0.2 * jax.random.normal(ks[0], (F_g, F_int), dtype),
        "bg": 0.1 * jax.random.normal(ks[1], (F_int,), dtype),
        "wx": 0.2 * jax.random.normal(ks[2], (F_l, F_int), dtype),
        "bx": 0.1 * jax.random.normal(ks[3], (F_int,), dtype),
        "wpsi": 0.2 * jax.random.normal(ks[4], (F_int, 1), dtype),
        "bpsi": 0.1 * jax.random.normal(ks[5], (1,), dtype),
        "bn_g": bn_params(ks[6], F_int),
        "bn_x": bn_params(ks[7], F_int),
        "bn_psi": bn_params(ks[8], 1),
    }


if __name__ == "__main__":
    key = jax.random.PRNGKey(0)
    kg, kx, kp = jax.random.split(key, 3)

    # --- Test 1: exact fp32 path ---------------------------------------------
    N, H, W = 2, 16, 16
    F_g, F_l, F_int = 4, 4, 8
    g = jax.random.normal(kg, (N, F_g, H, W), jnp.float32)
    x = jax.random.normal(kx, (N, F_l, H, W), jnp.float32)
    params = make_params(kp, F_g, F_l, F_int)

    ref = attention_block_ref(g, x, params)
    out = attention_block(g, x, params, activation_dtype=jnp.float32)
    out = jax.block_until_ready(out)
    assert out.shape == (N, F_l, H, W)
    assert jnp.allclose(out, ref, atol=1e-5, rtol=1e-5), "mismatch vs reference (f32)"

    # --- Test 2: default bandwidth-optimized path (bf16 activations) ---------
    out_bf16 = attention_block(g, x, params)
    out_bf16 = jax.block_until_ready(out_bf16)
    assert out_bf16.dtype == jnp.bfloat16
    assert jnp.allclose(out_bf16.astype(jnp.float32), ref, atol=1e-1, rtol=1e-1), \
        "mismatch vs reference (bf16 activations)"

    # --- Test 3: ragged HW (no pad/crop), asymmetric channels, N=1 -----------
    kg2, kx2, kp2 = jax.random.split(jax.random.PRNGKey(1), 3)
    N2, H2, W2 = 1, 24, 24                      # HW = 576, tile_p=256 -> ragged last block
    Fg2, Fl2, Fi2 = 6, 4, 8
    g2 = jax.random.normal(kg2, (N2, Fg2, H2, W2), jnp.float32)
    x2 = jax.random.normal(kx2, (N2, Fl2, H2, W2), jnp.float32)
    params2 = make_params(kp2, Fg2, Fl2, Fi2)
    ref2 = attention_block_ref(g2, x2, params2)
    out2 = attention_block(g2, x2, params2, tile_p=256, activation_dtype=jnp.float32)
    out2 = jax.block_until_ready(out2)
    assert jnp.allclose(out2, ref2, atol=1e-5, rtol=1e-5), "mismatch vs reference (ragged)"

    print("KERNEL_OK")
</pallas_src>

<mosaic_0001>
module attributes {stable_mosaic.version = 11 : i64} {
  func.func @_attention_kernel(%arg0: i32, %arg1: i32, %arg2: memref<1x4x256xf32, #tpu.memory_space<vmem>>, %arg3: memref<1x4x256xf32, #tpu.memory_space<vmem>>, %arg4: memref<8x4xf32, #tpu.memory_space<vmem>>, %arg5: memref<8x4xf32, #tpu.memory_space<vmem>>, %arg6: memref<8x1xf32, #tpu.memory_space<vmem>>, %arg7: memref<8x1xf32, #tpu.memory_space<vmem>>, %arg8: memref<1xf32, #tpu.memory_space<smem>>, %arg9: memref<1x4x256xf32, #tpu.memory_space<vmem>>) attributes {dimension_semantics = [#tpu.dimension_semantics<parallel>, #tpu.dimension_semantics<parallel>], iteration_bounds = array<i64: 2, 1>, scalar_prefetch = 0 : i64, scratch_operands = 0 : i64, tpu.core_type = #tpu.core_type<tc>, window_params = [{transform_indices = @transform_0, window_bounds = array<i64: 1, 4, 256>}, {transform_indices = @transform_1, window_bounds = array<i64: 1, 4, 256>}, {pipeline_mode = #tpu.pipeline_mode<synchronous>, transform_indices = @transform_2, window_bounds = array<i64: 8, 4>}, {pipeline_mode = #tpu.pipeline_mode<synchronous>, transform_indices = @transform_3, window_bounds = array<i64: 8, 4>}, {pipeline_mode = #tpu.pipeline_mode<synchronous>, transform_indices = @transform_4, window_bounds = array<i64: 8, 1>}, {pipeline_mode = #tpu.pipeline_mode<synchronous>, transform_indices = @transform_5, window_bounds = array<i64: 8, 1>}, {transform_indices = @transform_6, window_bounds = array<i64: 1>}, {transform_indices = @transform_7, window_bounds = array<i64: 1, 4, 256>}]} {
    %c0 = arith.constant 0 : index
    %c0_0 = arith.constant 0 : index
    %0 = vector.load %arg4[%c0, %c0_0] : memref<8x4xf32, #tpu.memory_space<vmem>>, vector<8x4xf32>
    %c0_1 = arith.constant 0 : index
    %c0_2 = arith.constant 0 : index
    %c0_3 = arith.constant 0 : index
    %1 = vector.load %arg2[%c0_1, %c0_2, %c0_3] : memref<1x4x256xf32, #tpu.memory_space<vmem>>, vector<1x4x256xf32>
    %2 = vector.shape_cast %1 : vector<1x4x256xf32> to vector<4x256xf32>
    %cst = arith.constant dense<0.000000e+00> : vector<8x256xf32>
    %3 = tpu.matmul %0, %2, %cst {dimension_numbers = #tpu.dot_dimension_numbers<[1], [0], [0], [1], [0, 0, 1, 1], [], []>} : vector<8x4xf32>, vector<4x256xf32>, vector<8x256xf32> -> vector<8x256xf32>
    %c0_4 = arith.constant 0 : index
    %c0_5 = arith.constant 0 : index
    %4 = vector.load %arg5[%c0_4, %c0_5] : memref<8x4xf32, #tpu.memory_space<vmem>>, vector<8x4xf32>
    %c0_6 = arith.constant 0 : index
    %c0_7 = arith.constant 0 : index
    %c0_8 = arith.constant 0 : index
    %5 = vector.load %arg3[%c0_6, %c0_7, %c0_8] : memref<1x4x256xf32, #tpu.memory_space<vmem>>, vector<1x4x256xf32>
    %6 = vector.shape_cast %5 : vector<1x4x256xf32> to vector<4x256xf32>
    %cst_9 = arith.constant dense<0.000000e+00> : vector<8x256xf32>
    %7 = tpu.matmul %4, %6, %cst_9 {dimension_numbers = #tpu.dot_dimension_numbers<[1], [0], [0], [1], [0, 0, 1, 1], [], []>} : vector<8x4xf32>, vector<4x256xf32>, vector<8x256xf32> -> vector<8x256xf32>
    %8 = arith.addf %3, %7 : vector<8x256xf32>
    %c0_10 = arith.constant 0 : index
    %c0_11 = arith.constant 0 : index
    %9 = vector.load %arg6[%c0_10, %c0_11] : memref<8x1xf32, #tpu.memory_space<vmem>>, vector<8x1xf32>
    %10 = vector.broadcast %9 : vector<8x1xf32> to vector<8x256xf32>
    %11 = arith.addf %8, %10 : vector<8x256xf32>
    %cst_12 = arith.constant 0.000000e+00 : f32
    %12 = vector.broadcast %cst_12 : f32 to vector<8x256xf32>
    %13 = arith.maximumf %11, %12 : vector<8x256xf32>
    %c0_13 = arith.constant 0 : index
    %c0_14 = arith.constant 0 : index
    %14 = vector.load %arg7[%c0_13, %c0_14] : memref<8x1xf32, #tpu.memory_space<vmem>>, vector<8x1xf32>
    %15 = vector.broadcast %14 : vector<8x1xf32> to vector<8x256xf32>
    %16 = arith.mulf %13, %15 : vector<8x256xf32>
    %cst_15 = arith.constant dense<0.000000e+00> : vector<256xf32>
    %17 = vector.multi_reduction <add>, %16, %cst_15 [0] : vector<8x256xf32> to vector<256xf32>
    %18 = vector.shape_cast %17 : vector<256xf32> to vector<1x256xf32>
    %c0_16 = arith.constant 0 : index
    %19 = memref.load %arg8[%c0_16] : memref<1xf32, #tpu.memory_space<smem>>
    %20 = vector.broadcast %19 : f32 to vector<1x256xf32>
    %21 = arith.addf %18, %20 : vector<1x256xf32>
    %22 = arith.negf %21 : vector<1x256xf32>
    %23 = math.exp %22 : vector<1x256xf32>
    %cst_17 = arith.constant 1.000000e+00 : f32
    %24 = vector.broadcast %cst_17 : f32 to vector<1x256xf32>
    %25 = arith.addf %24, %23 : vector<1x256xf32>
    %26 = arith.divf %24, %25 : vector<1x256xf32>
    %c0_18 = arith.constant 0 : index
    %c0_19 = arith.constant 0 : index
    %c0_20 = arith.constant 0 : index
    %27 = vector.load %arg3[%c0_18, %c0_19, %c0_20] : memref<1x4x256xf32, #tpu.memory_space<vmem>>, vector<1x4x256xf32>
    %28 = vector.shape_cast %27 : vector<1x4x256xf32> to vector<4x256xf32>
    %29 = vector.broadcast %26 : vector<1x256xf32> to vector<4x256xf32>
    %30 = arith.mulf %28, %29 : vector<4x256xf32>
    %c0_21 = arith.constant 0 : index
    %c0_22 = arith.constant 0 : index
    %c0_23 = arith.constant 0 : index
    %31 = vector.load %arg9[%c0_21, %c0_22, %c0_23] : memref<1x4x256xf32, #tpu.memory_space<vmem>>, vector<1x4x256xf32>
    %32 = vector.shape_cast %31 : vector<1x4x256xf32> to vector<4x256xf32>
    %33 = vector.shape_cast %30 : vector<4x256xf32> to vector<1x4x256xf32>
    tpu.vector_store %arg9[%c0_21, %c0_22, %c0_23], %33 {strides = array<i32>} : memref<1x4x256xf32, #tpu.memory_space<vmem>>, vector<1x4x256xf32>,
    return
  }
  func.func @transform_0(%arg0: i32, %arg1: i32) -> (i32, i32, i32) {
    %c0_i32 = arith.constant 0 : i32
    %c0_i32_0 = arith.constant 0 : i32
    return %arg0, %c0_i32, %arg1 : i32, i32, i32
  }
  func.func @transform_1(%arg0: i32, %arg1: i32) -> (i32, i32, i32) {
    %c0_i32 = arith.constant 0 : i32
    %c0_i32_0 = arith.constant 0 : i32
    return %arg0, %c0_i32, %arg1 : i32, i32, i32
  }
  func.func @transform_2(%arg0: i32, %arg1: i32) -> (i32, i32) {
    %c0_i32 = arith.constant 0 : i32
    %c0_i32_0 = arith.constant 0 : i32
    %c0_i32_1 = arith.constant 0 : i32
    return %c0_i32, %c0_i32_0 : i32, i32
  }
  func.func @transform_3(%arg0: i32, %arg1: i32) -> (i32, i32) {
    %c0_i32 = arith.constant 0 : i32
    %c0_i32_0 = arith.constant 0 : i32
    %c0_i32_1 = arith.constant 0 : i32
    return %c0_i32, %c0_i32_0 : i32, i32
  }
  func.func @transform_4(%arg0: i32, %arg1: i32) -> (i32, i32) {
    %c0_i32 = arith.constant 0 : i32
    %c0_i32_0 = arith.constant 0 : i32
    %c0_i32_1 = arith.constant 0 : i32
    return %c0_i32, %c0_i32_0 : i32, i32
  }
  func.func @transform_5(%arg0: i32, %arg1: i32) -> (i32, i32) {
    %c0_i32 = arith.constant 0 : i32
    %c0_i32_0 = arith.constant 0 : i32
    %c0_i32_1 = arith.constant 0 : i32
    return %c0_i32, %c0_i32_0 : i32, i32
  }
  func.func @transform_6(%arg0: i32, %arg1: i32) -> i32 {
    %c0_i32 = arith.constant 0 : i32
    %c0_i32_0 = arith.constant 0 : i32
    return %c0_i32 : i32
  }
  func.func @transform_7(%arg0: i32, %arg1: i32) -> (i32, i32, i32) {
    %c0_i32 = arith.constant 0 : i32
    %c0_i32_0 = arith.constant 0 : i32
    return %arg0, %c0_i32, %arg1 : i32, i32, i32
  }
}

</mosaic_0001>

<llo_original>
// kernel: tpu_custom_call.1
$region0: #{tpu_custom_call.1}
  #allocation0 [shape = 'u32[]', space=smem, size = 0x4, offset = 0x4, fixed_abs, tag = 'smem constant byte address 0x4 - core index']
  #allocation1 [shape = 'u32[72,128]{1,0:T(1,128)}', space=vmem, size = 0x9000, scoped, tag = 'internal scratch']
  #allocation2 [shape = 'f32[1]{0:T(128)S(6)}', space=smem, size = 0x200, scoped, tag = 'scoped memory for tpu_custom_call.1']
  %s0 = inlined_call_operand.vmem [shape: f32[2,4,256], index: 0, kind: input, shape index: {}]
  %s1 = inlined_call_operand.vmem [shape: f32[2,4,256], index: 1, kind: input, shape index: {}]
  %s2 = inlined_call_operand.vmem [shape: f32[8,4], index: 2, kind: input, shape index: {}]
  %s3 = inlined_call_operand.vmem [shape: f32[8,4], index: 3, kind: input, shape index: {}]
  %s4 = inlined_call_operand.vmem [shape: f32[8,1], index: 4, kind: input, shape index: {}]
  %s5 = inlined_call_operand.vmem [shape: f32[8,1], index: 5, kind: input, shape index: {}]
  %s6 = inlined_call_operand.<no memory space> [shape: f32[1], index: 6, kind: input, shape index: {}]
  %s7 = inlined_call_operand.hbm [shape: f32[2,4,256], index: 7, kind: output, shape index: {}]
  %s8 = sld [smem:[#allocation0]]
  $region61: #{tpu_custom_call.1} parent=0
    _
  %s10 = ssub.s32 1, %s8
  %s11 = scalar_select 0, %s10, %s8
  %12 = sst [smem:[#allocation2]] %s6
  $region1: #{tpu_custom_call.1} parent=0
    #allocation3 [shape = 'u8[8192]{0}', space=vmem, size = 0x2000, scoped, tag = 'output window, operand 0']
    #allocation4 [shape = 's32[2]{0}', space=sflag, size = 0x8, scoped, tag = 'scoped memory for tpu_custom_call.1']
    %13 = vsyncpa [#allocation4], 0
    %s14 = scalar_lea.sflag [#allocation4], 1
    %15 = vsyncpa %s14, 0
    loop: start=0, step=1, limit=4
    $region2: #{tpu_custom_call.1} parent=1 // loop_pre_header
      _
    $region3: #{tpu_custom_call.1} parent=1 // loop_header
      %s17 = sphi 0, %s21
      %p18 = scmp.ge.s32.totalorder %s17, 4
      %s24 = sphi 0, %s36
      %s25 = sphi 0, %s32
      %s26 = sphi 0, %s24
      %s27 = sphi 0, %s25
      %s28 = sphi 0, %s26
      %s29 = sphi 0, %s27
      %s41 = sphi 0, %s43
      %s44 = sphi 0, %s41
      %s45 = sphi 0, %s44
      %s61 = sphi 0, %s45
      %s69 = sphi 0, %s71
      %s72 = sphi 0, %s69
      %s73 = sphi 0, %s72
      %s89 = sphi 0, %s73
      %s93 = sphi 0, %s93
      %s95 = sphi 0, %s93
      %s96 = sphi 0, %s95
      %s110 = sphi 0, %s96
      %s114 = sphi 0, %s114
      %s116 = sphi 0, %s114
      %s117 = sphi 0, %s116
      %s131 = sphi 0, %s117
      %s135 = sphi 0, %s135
      %s137 = sphi 0, %s135
      %s138 = sphi 0, %s137
      %s152 = sphi 0, %s138
      %s156 = sphi 0, %s156
      %s158 = sphi 0, %s156
      %s159 = sphi 0, %s158
      %s173 = sphi 0, %s159
      %s177 = sphi 0, %s177
      %s179 = sphi 0, %s177
      %s180 = sphi 0, %s179
      %s194 = sphi 0, %s180
      %s202 = sphi 0, %s204
      %s205 = sphi 0, %s202
      %s206 = sphi 0, %s205
      %s222 = sphi 0, %s206
    $region4: #{tpu_custom_call.1} parent=1 // loop_header_branch
      %20 = sbr.rel (%p18) target = $region8
    $region5: #{tpu_custom_call.1} parent=1 // loop_body
      %s22 = ssub.s32 %s17, 1
      %s23 = ssub.s32 %s17, 2
      %s30 = sadd.s32 1, %s25
      %p31 = scmp.ge.s32.totalorder %s30, 1
      %s32 = scalar_select %p31, 0, %s30
      %s33 = sadd.s32 1, %s24
      %s34 = scalar_select %p31, %s33, %s24
      %p35 = scmp.ge.s32.totalorder %s34, 2
      %s36 = scalar_select %p35, 0, %s34
      %s37 = ssub.s32 %s24, %s36
      %s38 = ssub.s32 %s25, %s32
      %s39 = sor.u32 %s37, %s38
      %p40 = scmp.eq.s32.totalorder %s39, 0
      %s42 = sadd.s32 %s41, 1
      %s43 = scalar_select %p40, %s41, %s42
      %p46 = pneg %p40
      %p47 = scmp.eq.s32.totalorder %s17, 1
      %p48 = por %p46, %p47
      %p49 = scmp.ne.s32.totalorder %s41, %s44
      %p50 = scmp.eq.s32.totalorder %s17, 0
      %p51 = por %p49, %p50
      %p52 = scmp.ne.s32.totalorder %s41, %s44
      %p53 = scmp.eq.s32.totalorder %s22, 1
      %p54 = por %p52, %p53
      %p55 = scmp.ne.s32.totalorder %s44, %s45
      %p56 = scmp.eq.s32.totalorder %s22, 0
      %p57 = por %p55, %p56
      %p58 = scmp.ne.s32.totalorder %s44, %s45
      %p59 = scmp.eq.s32.totalorder %s23, 1
      %p60 = por %p58, %p59
      %p62 = scmp.ne.s32.totalorder %s45, %s61
      %p63 = scmp.eq.s32.totalorder %s23, 0
      %p64 = por %p62, %p63
      %s65 = ssub.s32 %s24, %s36
      %s66 = ssub.s32 %s25, %s32
      %s67 = sor.u32 %s65, %s66
      %p68 = scmp.eq.s32.totalorder %s67, 0
      %s70 = sadd.s32 %s69, 1
      %s71 = scalar_select %p68, %s69, %s70
      %p74 = pneg %p68
      %p75 = scmp.eq.s32.totalorder %s17, 1
      %p76 = por %p74, %p75
      %p77 = scmp.ne.s32.totalorder %s69, %s72
      %p78 = scmp.eq.s32.totalorder %s17, 0
      %p79 = por %p77, %p78
      %p80 = scmp.ne.s32.totalorder %s69, %s72
      %p81 = scmp.eq.s32.totalorder %s22, 1
      %p82 = por %p80, %p81
      %p83 = scmp.ne.s32.totalorder %s72, %s73
      %p84 = scmp.eq.s32.totalorder %s22, 0
      %p85 = por %p83, %p84
      %p86 = scmp.ne.s32.totalorder %s72, %s73
      %p87 = scmp.eq.s32.totalorder %s23, 1
      %p88 = por %p86, %p87
      %p90 = scmp.ne.s32.totalorder %s73, %s89
      %p91 = scmp.eq.s32.totalorder %s23, 0
      %p92 = por %p90, %p91
      %s94 = sadd.s32 %s93, 1
      %p97 = scmp.eq.s32.totalorder %s17, 1
      %p98 = scmp.ne.s32.totalorder %s93, %s95
      %p99 = scmp.eq.s32.totalorder %s17, 0
      %p100 = por %p98, %p99
      %p101 = scmp.ne.s32.totalorder %s93, %s95
      %p102 = scmp.eq.s32.totalorder %s22, 1
      %p103 = por %p101, %p102
      %p104 = scmp.ne.s32.totalorder %s95, %s96
      %p105 = scmp.eq.s32.totalorder %s22, 0
      %p106 = por %p104, %p105
      %p107 = scmp.ne.s32.totalorder %s95, %s96
      %p108 = scmp.eq.s32.totalorder %s23, 1
      %p109 = por %p107, %p108
      %p111 = scmp.ne.s32.totalorder %s96, %s110
      %p112 = scmp.eq.s32.totalorder %s23, 0
      %p113 = por %p111, %p112
      %s115 = sadd.s32 %s114, 1
      %p118 = scmp.eq.s32.totalorder %s17, 1
      %p119 = scmp.ne.s32.totalorder %s114, %s116
      %p120 = scmp.eq.s32.totalorder %s17, 0
      %p121 = por %p119, %p120
      %p122 = scmp.ne.s32.totalorder %s114, %s116
      %p123 = scmp.eq.s32.totalorder %s22, 1
      %p124 = por %p122, %p123
      %p125 = scmp.ne.s32.totalorder %s116, %s117
      %p126 = scmp.eq.s32.totalorder %s22, 0
      %p127 = por %p125, %p126
      %p128 = scmp.ne.s32.totalorder %s116, %s117
      %p129 = scmp.eq.s32.totalorder %s23, 1
      %p130 = por %p128, %p129
      %p132 = scmp.ne.s32.totalorder %s117, %s131
      %p133 = scmp.eq.s32.totalorder %s23, 0
      %p134 = por %p132, %p133
      %s136 = sadd.s32 %s135, 1
      %p139 = scmp.eq.s32.totalorder %s17, 1
      %p140 = scmp.ne.s32.totalorder %s135, %s137
      %p141 = scmp.eq.s32.totalorder %s17, 0
      %p142 = por %p140, %p141
      %p143 = scmp.ne.s32.totalorder %s135, %s137
      %p144 = scmp.eq.s32.totalorder %s22, 1
      %p145 = por %p143, %p144
      %p146 = scmp.ne.s32.totalorder %s137, %s138
      %p147 = scmp.eq.s32.totalorder %s22, 0
      %p148 = por %p146, %p147
      %p149 = scmp.ne.s32.totalorder %s137, %s138
      %p150 = scmp.eq.s32.totalorder %s23, 1
      %p151 = por %p149, %p150
      %p153 = scmp.ne.s32.totalorder %s138, %s152
      %p154 = scmp.eq.s32.totalorder %s23, 0
      %p155 = por %p153, %p154
      %s157 = sadd.s32 %s156, 1
      %p160 = scmp.eq.s32.totalorder %s17, 1
      %p161 = scmp.ne.s32.totalorder %s156, %s158
      %p162 = scmp.eq.s32.totalorder %s17, 0
      %p163 = por %p161, %p162
      %p164 = scmp.ne.s32.totalorder %s156, %s158
      %p165 = scmp.eq.s32.totalorder %s22, 1
      %p166 = por %p164, %p165
      %p167 = scmp.ne.s32.totalorder %s158, %s159
      %p168 = scmp.eq.s32.totalorder %s22, 0
      %p169 = por %p167, %p168
      %p170 = scmp.ne.s32.totalorder %s158, %s159
      %p171 = scmp.eq.s32.totalorder %s23, 1
      %p172 = por %p170, %p171
      %p174 = scmp.ne.s32.totalorder %s159, %s173
      %p175 = scmp.eq.s32.totalorder %s23, 0
      %p176 = por %p174, %p175
      %s178 = sadd.s32 %s177, 1
      %p181 = scmp.eq.s32.totalorder %s17, 1
      %p182 = scmp.ne.s32.totalorder %s177, %s179
      %p183 = scmp.eq.s32.totalorder %s17, 0
      %p184 = por %p182, %p183
      %p185 = scmp.ne.s32.totalorder %s177, %s179
      %p186 = scmp.eq.s32.totalorder %s22, 1
      %p187 = por %p185, %p186
      %p188 = scmp.ne.s32.totalorder %s179, %s180
      %p189 = scmp.eq.s32.totalorder %s22, 0
      %p190 = por %p188, %p189
      %p191 = scmp.ne.s32.totalorder %s179, %s180
      %p192 = scmp.eq.s32.totalorder %s23, 1
      %p193 = por %p191, %p192
      %p195 = scmp.ne.s32.totalorder %s180, %s194
      %p196 = scmp.eq.s32.totalorder %s23, 0
      %p197 = por %p195, %p196
      %s198 = ssub.s32 %s24, %s36
      %s199 = ssub.s32 %s25, %s32
      %s200 = sor.u32 %s198, %s199
      %p201 = scmp.eq.s32.totalorder %s200, 0
      %s203 = sadd.s32 %s202, 1
      %s204 = scalar_select %p201, %s202, %s203
      %p207 = pneg %p201
      %p208 = scmp.eq.s32.totalorder %s17, 1
      %p209 = por %p207, %p208
      %p210 = scmp.ne.s32.totalorder %s202, %s205
      %p211 = scmp.eq.s32.totalorder %s17, 0
      %p212 = por %p210, %p211
      %p213 = scmp.ne.s32.totalorder %s202, %s205
      %p214 = scmp.eq.s32.totalorder %s22, 1
      %p215 = por %p213, %p214
      %p216 = scmp.ne.s32.totalorder %s205, %s206
      %p217 = scmp.eq.s32.totalorder %s22, 0
      %p218 = por %p216, %p217
      %p219 = scmp.ne.s32.totalorder %s205, %s206
      %p220 = scmp.eq.s32.totalorder %s23, 1
      %p221 = por %p219, %p220
      %p223 = scmp.ne.s32.totalorder %s206, %s222
      %p224 = scmp.eq.s32.totalorder %s23, 0
      %p225 = por %p223, %p224
      %p226 = scmp.le.s32.totalorder 1, %s17
      %p227 = scmp.lt.s32.totalorder %s17, 3
      %p228 = pnand %p226, %p227
      %p229 = pneg %p228
      // Predicated region
      $region9: #{tpu_custom_call.1} parent=5 // pred_check
        _
      $region10: #{tpu_custom_call.1} parent=5 // pred_check_branch
        %231 = sbr.rel (%p228) target = $region12
      $region11: #{tpu_custom_call.1} parent=5 // pred_region
        %s232 = ssub.s32 %s17, 1
        // Predicated region
        $region13: #{tpu_custom_call.1} parent=11 // pred_check
          %p233 = pneg %p106
        $region14: #{tpu_custom_call.1} parent=11 // pred_check_branch
          %235 = sbr.rel (%p233) target = $region16
        $region15: #{tpu_custom_call.1} parent=11 // pred_region
          _
        $region16: #{tpu_custom_call.1} parent=11 // pred_fallthru
          _
        // Predicated region
        $region17: #{tpu_custom_call.1} parent=11 // pred_check
          %p236 = pneg %p127
        $region18: #{tpu_custom_call.1} parent=11 // pred_check_branch
          %238 = sbr.rel (%p236) target = $region20
        $region19: #{tpu_custom_call.1} parent=11 // pred_region
          _
        $region20: #{tpu_custom_call.1} parent=11 // pred_fallthru
          _
        // Predicated region
        $region21: #{tpu_custom_call.1} parent=11 // pred_check
          %p239 = pneg %p148
        $region22: #{tpu_custom_call.1} parent=11 // pred_check_branch
          %241 = sbr.rel (%p239) target = $region24
        $region23: #{tpu_custom_call.1} parent=11 // pred_region
          _
        $region24: #{tpu_custom_call.1} parent=11 // pred_fallthru
          _
        // Predicated region
        $region25: #{tpu_custom_call.1} parent=11 // pred_check
          %p242 = pneg %p169
        $region26: #{tpu_custom_call.1} parent=11 // pred_check_branch
          %244 = sbr.rel (%p242) target = $region28
        $region27: #{tpu_custom_call.1} parent=11 // pred_region
          _
        $region28: #{tpu_custom_call.1} parent=11 // pred_fallthru
          _
        // Predicated region
        $region29: #{tpu_custom_call.1} parent=11 // pred_check
          %p245 = pneg %p190
        $region30: #{tpu_custom_call.1} parent=11 // pred_check_branch
          %247 = sbr.rel (%p245) target = $region32
        $region31: #{tpu_custom_call.1} parent=11 // pred_region
          _
        $region32: #{tpu_custom_call.1} parent=11 // pred_fallthru
          _
      $region12: #{tpu_custom_call.1} parent=5 // pred_fallthru
        _
      %p248 = scmp.lt.s32.totalorder %s17, 2
      // Predicated region
      $region33: #{tpu_custom_call.1} parent=5 // pred_check
        %p249 = pneg %p248
      $region34: #{tpu_custom_call.1} parent=5 // pred_check_branch
        %251 = sbr.rel (%p249) target = $region36
      $region35: #{tpu_custom_call.1} parent=5 // pred_region
        // Predicated region
        $region37: #{tpu_custom_call.1} parent=35 // pred_check
          %p252 = pneg %p51
        $region38: #{tpu_custom_call.1} parent=35 // pred_check_branch
          %254 = sbr.rel (%p252) target = $region40
        $region39: #{tpu_custom_call.1} parent=35 // pred_region
          %s255 = smul.u32 2, %s25
          %p256 = scmp.lt.s32.totalorder %s24, 1
          %s257 = scalar_select %p256, %s24, 1
          %p258 = scmp.lt.s32.totalorder %s255, 1
          %s259 = scalar_select %p258, %s255, 1
          %s260 = smul.addr %s257, 2
          %s261 = sadd.s32 %s259, %s260
          %s262 = smul.addr %s261, 4
          %s263 = scalar_lea.vmem %s0, %s262
          %s264 = smul.u32 2, %s25
        $region40: #{tpu_custom_call.1} parent=35 // pred_fallthru
          _
        // Predicated region
        $region41: #{tpu_custom_call.1} parent=35 // pred_check
          %p265 = pneg %p79
        $region42: #{tpu_custom_call.1} parent=35 // pred_check_branch
          %267 = sbr.rel (%p265) target = $region44
        $region43: #{tpu_custom_call.1} parent=35 // pred_region
          %s268 = smul.u32 2, %s25
          %p269 = scmp.lt.s32.totalorder %s24, 1
          %s270 = scalar_select %p269, %s24, 1
          %p271 = scmp.lt.s32.totalorder %s268, 1
          %s272 = scalar_select %p271, %s268, 1
          %s273 = smul.addr %s270, 2
          %s274 = sadd.s32 %s272, %s273
          %s275 = smul.addr %s274, 4
          %s276 = scalar_lea.vmem %s1, %s275
          %s277 = smul.u32 2, %s25
        $region44: #{tpu_custom_call.1} parent=35 // pred_fallthru
          _
      $region36: #{tpu_custom_call.1} parent=5 // pred_fallthru
        _
      %p278 = scmp.le.s32.totalorder 1, %s17
      %p279 = scmp.lt.s32.totalorder %s17, 3
      %p280 = pnand %p278, %p279
      %p281 = pneg %p280
      // Predicated region
      $region45: #{tpu_custom_call.1} parent=5 // pred_check
        _
      $region46: #{tpu_custom_call.1} parent=5 // pred_check_branch
        %283 = sbr.rel (%p280) target = $region48
      $region47: #{tpu_custom_call.1} parent=5 // pred_region
        %s284 = ssub.s32 %s17, 1
        %s285 = smul.u32 2, %s27
        %p286 = scmp.lt.s32.totalorder %s26, 1
        %s287 = scalar_select %p286, %s26, 1
        %p288 = scmp.lt.s32.totalorder %s285, 1
        %s289 = scalar_select %p288, %s285, 1
        %s290 = smul.addr %s287, 2
        %s291 = sadd.s32 %s289, %s290
        %s292 = smul.addr %s291, 4
        %s293 = scalar_lea.vmem %s0, %s292
        %p294 = pneg %p57
        %p295 = pneg %p54
        %s296 = smul.u32 2, %s27
        %p297 = scmp.lt.s32.totalorder %s26, 1
        %s298 = scalar_select %p297, %s26, 1
        %p299 = scmp.lt.s32.totalorder %s296, 1
        %s300 = scalar_select %p299, %s296, 1
        %s301 = smul.addr %s298, 2
        %s302 = sadd.s32 %s300, %s301
        %s303 = smul.addr %s302, 4
        %s304 = scalar_lea.vmem %s1, %s303
        %p305 = pneg %p85
        %p306 = pneg %p82
        %p307 = pneg %p106
        %p308 = pneg %p103
        %p309 = pneg %p127
        %p310 = pneg %p124
        %p311 = pneg %p148
        %p312 = pneg %p145
        %p313 = pneg %p169
        %p314 = pneg %p166
        %p315 = pneg %p190
        %p316 = pneg %p187
        %p317 = pneg %p218
        %p318 = pneg %p215
        %s319 = sand.u32 %s205, 1
        %s320 = scalar_lea.sflag [#allocation4], %s319
        %s321 = sand.u32 %s205, 1
        %s322 = smul.addr %s321, 8
        %s323 = scalar_lea.vmem [#allocation3], %s322
        %s324 = smul.u32 2, %s27
        %p325 = scmp.lt.s32.totalorder %s26, 1
        %s326 = scalar_select %p325, %s26, 1
        %p327 = scmp.lt.s32.totalorder %s324, 1
        %s328 = scalar_select %p327, %s324, 1
        %s329 = smul.addr %s326, 2
        %s330 = sadd.s32 %s328, %s329
        %s331 = smul.addr %s330, 4
        %s332 = scalar_lea.vmem %s0, %s331
        %s333 = smul.u32 2, %s27
        %s334 = smul.u32 2, %s27
        %p335 = scmp.lt.s32.totalorder %s26, 1
        %s336 = scalar_select %p335, %s26, 1
        %p337 = scmp.lt.s32.totalorder %s334, 1
        %s338 = scalar_select %p337, %s334, 1
        %s339 = smul.addr %s336, 2
        %s340 = sadd.s32 %s338, %s339
        %s341 = smul.addr %s340, 4
        %s342 = scalar_lea.vmem %s1, %s341
        %s343 = smul.u32 2, %s27
        %s344 = smul.u32 2, %s27
        %v345 = vld [vmem:[%s2] sm:$0xff]
        %v346 = vld [vmem:[%s332] sm:$0xff]
        %v347 = vld [vmem:[%s3] sm:$0xff]
        %v348 = vld [vmem:[%s342] sm:$0xff]
        %350 = vst [vmem:[#allocation1] ss:$2 sm:$0xff] %v348
        %v351 = vld.sshfl [vmem:[#allocation1] sm:$0xff pattern:$0x75316420]
        %v352 = vld.sshfl [vmem:[#allocation1 + $0x8] sm:$0xff pattern:$0x75316420]
        %vm353 = vcmask 31744
        %v355 = vsel %vm353, %v347, 0
        %vm357 = vcmask 1043456
        %v358 = vsel %vm357, %v351, 0
        %v360 = vsel %vm357, %v352, 0
        %362 = vmatpush.msra.mxu0 0.0
        %363 = vmatpush.msra.mxu0 0.0
        %364 = vmatpush.msra.mxu0 0.0
        %365 = vmatpush.msra.mxu0 0.0
        %366 = vmatpush.msra.mxu0 0.0
        %367 = vmatpush.msra.mxu0 0.0
        %368 = vmatpush.msra.mxu0 0.0
        %369 = vmatpush.msra.mxu0 0.0
        %370 = vmatpush.msra.mxu0 0.0
        %371 = vmatpush.msra.mxu0 0.0
        %372 = vmatpush.msra.mxu0 0.0
        %373 = vmatpush.msra.mxu0 0.0
        %374 = vmatpush.msra.mxu0 0.0
        %375 = vmatpush.msra.mxu0 0.0
        %376 = vmatpush.msra.mxu0 0.0
        %377 = vmatpush.msra.mxu0 %v358
        %378 = vmatmul.f32.gmra.mxu0 %v355
        %v379 = vpop.f32.mrf.mxu0
        %v380 = vadd.f32 0.0, %v379
        %381 = vdwg.mxu0
        %382 = vmatpush.msra.mxu0 0.0
        %383 = vmatpush.msra.mxu0 0.0
        %384 = vmatpush.msra.mxu0 0.0
        %385 = vmatpush.msra.mxu0 0.0
        %386 = vmatpush.msra.mxu0 0.0
        %387 = vmatpush.msra.mxu0 0.0
        %388 = vmatpush.msra.mxu0 0.0
        %389 = vmatpush.msra.mxu0 0.0
        %390 = vmatpush.msra.mxu0 0.0
        %391 = vmatpush.msra.mxu0 0.0
        %392 = vmatpush.msra.mxu0 0.0
        %393 = vmatpush.msra.mxu0 0.0
        %394 = vmatpush.msra.mxu0 0.0
        %395 = vmatpush.msra.mxu0 0.0
        %396 = vmatpush.msra.mxu0 0.0
        %397 = vmatpush.msra.mxu0 %v360
        %398 = vmatmul.f32.gmra.mxu0 %v355
        %v399 = vpop.f32.mrf.mxu0
        %v400 = vadd.f32 0.0, %v399
        %401 = vdwg.mxu0
        %403 = vst [vmem:[#allocation1] ss:$2 sm:$0xff] %v346
        %v404 = vld.sshfl [vmem:[#allocation1] sm:$0xff pattern:$0x75316420]
        %v405 = vld.sshfl [vmem:[#allocation1 + $0x8] sm:$0xff pattern:$0x75316420]
        %v407 = vsel %vm353, %v345, 0
        %v409 = vsel %vm357, %v404, 0
        %v411 = vsel %vm357, %v405, 0
        %413 = vmatpush.msra.mxu0 0.0
        %414 = vmatpush.msra.mxu0 0.0
        %415 = vmatpush.msra.mxu0 0.0
        %416 = vmatpush.msra.mxu0 0.0
        %417 = vmatpush.msra.mxu0 0.0
        %418 = vmatpush.msra.mxu0 0.0
        %419 = vmatpush.msra.mxu0 0.0
        %420 = vmatpush.msra.mxu0 0.0
        %421 = vmatpush.msra.mxu0 0.0
        %422 = vmatpush.msra.mxu0 0.0
        %423 = vmatpush.msra.mxu0 0.0
        %424 = vmatpush.msra.mxu0 0.0
        %425 = vmatpush.msra.mxu0 0.0
        %426 = vmatpush.msra.mxu0 0.0
        %427 = vmatpush.msra.mxu0 0.0
        %428 = vmatpush.msra.mxu0 %v409
        %429 = vmatmul.f32.gmra.mxu0 %v407
        %v430 = vpop.f32.mrf.mxu0
        %v431 = vadd.f32 %v380, %v430
        %432 = vdwg.mxu0
        %433 = vmatpush.msra.mxu0 0.0
        %434 = vmatpush.msra.mxu0 0.0
        %435 = vmatpush.msra.mxu0 0.0
        %436 = vmatpush.msra.mxu0 0.0
        %437 = vmatpush.msra.mxu0 0.0
        %438 = vmatpush.msra.mxu0 0.0
        %439 = vmatpush.msra.mxu0 0.0
        %440 = vmatpush.msra.mxu0 0.0
        %441 = vmatpush.msra.mxu0 0.0
        %442 = vmatpush.msra.mxu0 0.0
        %443 = vmatpush.msra.mxu0 0.0
        %444 = vmatpush.msra.mxu0 0.0
        %445 = vmatpush.msra.mxu0 0.0
        %446 = vmatpush.msra.mxu0 0.0
        %447 = vmatpush.msra.mxu0 0.0
        %448 = vmatpush.msra.mxu0 %v411
        %449 = vmatmul.f32.gmra.mxu0 %v407
        %v450 = vpop.f32.mrf.mxu0
        %v451 = vadd.f32 %v400, %v450
        %452 = vdwg.mxu0
        %v453 = vld [vmem:[%s4] sm:$0xff]
        %455 = vset.pattern.permute.xlu0 0
        %456 = vperm.xlu0 %455, %v453
        %v457 = vpop.permute.xlu0 %456
        %v459 = vadd.f32 %v431, %v457
        %v460 = vadd.f32 %v451, %v457
        %v461 = vmax.f32 %v459, 0.0
        %v462 = vmax.f32 %v460, 0.0
        %v463 = vld [vmem:[%s5] sm:$0xff]
        %465 = vset.pattern.permute.xlu0 0
        %466 = vperm.xlu0 %465, %v463
        %v467 = vpop.permute.xlu0 %466
        %v469 = vmul.f32 %v461, %v467
        %v470 = vmul.f32 %v462, %v467
        %v471 = vrot.slane %v469, 4
        %v472 = vadd.f32 %v469, %v471
        %v473 = vrot.slane %v472, 2
        %v474 = vadd.f32 %v472, %v473
        %v475 = vrot.slane %v474, 1
        %v476 = vadd.f32 %v474, %v475
        %v477 = vrot.slane %v470, 4
        %v478 = vadd.f32 %v470, %v477
        %v479 = vrot.slane %v478, 2
        %v480 = vadd.f32 %v478, %v479
        %v481 = vrot.slane %v480, 1
        %v482 = vadd.f32 %v480, %v481
        %s483 = sld [smem:[#allocation2]]
        %v484 = vstv %s483
        %v485 = vadd.f32 %v476, %v484
        %v486 = vadd.f32 %v482, %v484
        %v487 = vxor.u32 %v485, 2147483648
        %v488 = vxor.u32 %v486, 2147483648
        %v489 = vmul.f32 %v487, 1.442695
        %v490 = vpow.pop %v489
        %v491 = vmul.f32 %v488, 1.442695
        %v492 = vpow.pop %v491
        %v493 = vadd.f32 %v490, 1.0
        %v494 = vadd.f32 %v492, 1.0
        %v495 = vrcp.pop %v493
        %v496 = vmul.f32 %v493, %v495
        %v497 = vsub.f32 1.0, %v496
        %v498 = vmul.f32 %v495, %v497
        %v499 = vadd.f32 %v495, %v498
        %vm500 = vweird.f32 %v493
        %vm501 = vweird.f32 %v495
        %vm502 = vmor %vm500, %vm501
        %v503 = vsel %vm502, %v495, %v499
        %v504 = vand.u32 2147483647, %v493
        %vm505 = vcmp.eq.f32.partialorder %v504, 8.507059e+37
        %v506 = vand.u32 %v493, 2147483648
        %v507 = vor.u32 1.1754944e-38, %v506
        %v508 = vsel %vm505, %v507, %v503
        %v509 = vmul.f32 1.0, %v508
        %v510 = vrcp.pop %v494
        %v511 = vmul.f32 %v494, %v510
        %v512 = vsub.f32 1.0, %v511
        %v513 = vmul.f32 %v510, %v512
        %v514 = vadd.f32 %v510, %v513
        %vm515 = vweird.f32 %v494
        %vm516 = vweird.f32 %v510
        %vm517 = vmor %vm515, %vm516
        %v518 = vsel %vm517, %v510, %v514
        %v519 = vand.u32 2147483647, %v494
        %vm520 = vcmp.eq.f32.partialorder %v519, 8.507059e+37
        %v521 = vand.u32 %v494, 2147483648
        %v522 = vor.u32 1.1754944e-38, %v521
        %v523 = vsel %vm520, %v522, %v518
        %v524 = vmul.f32 1.0, %v523
        %v527 = vrot.slane %v524, 4
        %v528 = vsel %vm357, %v509, %v527
        %v530 = vmul.f32 %v348, %v528
        %531 = vst [vmem:[%s323] sm:$0xff] %v530
        %s532 = sand.u32 %s205, 1
        %s533 = scalar_lea.sflag [#allocation4], %s532
        %s534 = sand.u32 %s205, 1
        %s535 = smul.addr %s534, 8
        %s536 = scalar_lea.vmem [#allocation3], %s535
        // Predicated region
        $region49: #{tpu_custom_call.1} parent=47 // pred_check
          %p537 = pneg %p215
        $region50: #{tpu_custom_call.1} parent=47 // pred_check_branch
          %539 = sbr.rel (%p537) target = $region52
        $region51: #{tpu_custom_call.1} parent=47 // pred_region
          %s540 = smul.u32 2, %s27
          %542 = vsyncadd %s533, 0
          %s543 = smul.addr %s26, 2
          %s544 = sadd.s32 %s540, %s543
          %s545 = smul.addr %s544, 4
          %s546 = scalar_lea.hbm %s7, %s545
          %s548 = sshll.u32 %s536, 4
          %s549 = int_to_ptr.vmem [resolvable:$true] %s548
          %s550 = sshll.u32 %s546, 4
          %s551 = int_to_ptr.hbm [resolvable:$true] %s550
          %553 = dma.vmem_to_hbm [thread:$0]  %s549, 128, %s551, %s533
        $region52: #{tpu_custom_call.1} parent=47 // pred_fallthru
          _
      $region48: #{tpu_custom_call.1} parent=5 // pred_fallthru
        _
      %p554 = scmp.le.s32.totalorder 2, %s17
      // Predicated region
      $region53: #{tpu_custom_call.1} parent=5 // pred_check
        %p555 = pneg %p554
      $region54: #{tpu_custom_call.1} parent=5 // pred_check_branch
        %557 = sbr.rel (%p555) target = $region56
      $region55: #{tpu_custom_call.1} parent=5 // pred_region
        %s558 = ssub.s32 %s17, 2
        // Predicated region
        $region57: #{tpu_custom_call.1} parent=55 // pred_check
          %p559 = pneg %p221
        $region58: #{tpu_custom_call.1} parent=55 // pred_check_branch
          %561 = sbr.rel (%p559) target = $region60
        $region59: #{tpu_custom_call.1} parent=55 // pred_region
          %s562 = sand.u32 %s206, 1
          %s563 = scalar_lea.sflag [#allocation4], %s562
          %s564 = sand.u32 %s206, 1
          %s565 = smul.addr %s564, 8
          %s566 = scalar_lea.vmem [#allocation3], %s565
          %568 = dma.done %s563, 128
        $region60: #{tpu_custom_call.1} parent=55 // pred_fallthru
          _
      $region56: #{tpu_custom_call.1} parent=5 // pred_fallthru
        _
    $region6: #{tpu_custom_call.1} parent=1 // loop_footer
      %s21 = sadd.s32 1, %s17
    $region7: #{tpu_custom_call.1} parent=1 // loop_footer_branch
      %16 = sbr.rel target = $region3
    $region8: #{tpu_custom_call.1} parent=1 // loop_exit
      _
    %569 = vsyncpa [#allocation4], 1
    %s570 = scalar_lea.sflag [#allocation4], 1
    %571 = vsyncpa %s570, 1

</llo_original>
